<compile_context>
chip_gen: v7x
topology: tpu7x:2x2x1
jax: 0.10.0
libtpu: 0.0.40
codegen_flags: <defaults>
</compile_context>

<pallas_src>
import functools

import jax
import jax.numpy as jnp
from jax.experimental import pallas as pl
from jax.experimental.pallas import tpu as pltpu

_EPS = 1e-12  # F.normalize default eps


def _l2norm_kernel(x_ref, o_ref, *, G, K):
    # x_ref: (1, tn, G*K)   -- tn rows of the (B, N, G*K) view of the input
    # o_ref: (1, G, tn, K)  -- matching block of the transposed (B, G, N, K) output
    for g in range(G):  # G is small & static -> fully unrolled; slices are
        # lane-aligned (no relayout) whenever K % 128 == 0.
        xg = x_ref[0, :, pl.ds(g * K, K)].astype(jnp.float32)        # (tn, K)
        sq_sum = jnp.sum(xg * xg, axis=-1, keepdims=True)            # (tn, 1) (XLU)
        inv = jax.lax.rsqrt(jnp.maximum(sq_sum, _EPS * _EPS))        # (tn, 1) (EUP)
        o_ref[0, g, :, :] = (xg * inv).astype(o_ref.dtype)


def grouped_double_normalization(
    x,
    num_groups,
    *,
    max_tile_rows=1024,
    vmem_budget_bytes=24 * 1024 * 1024,
):
    """x: (B, N, M, d) float array. Returns L2-normalized (B, G, N, M*d//G)."""
    B, N, M, d = x.shape
    G = int(num_groups)
    assert (M * d) % G == 0, "M*d must be divisible by num_groups"
    K = (M * d) // G
    GK = G * K

    # Free view: (B, N, M, d) -> (B, N, G*K).  The (1,2) transpose is done by the
    # output BlockSpec / DMA scatter, not by a separate XLA transpose through HBM.
    x3 = x.reshape(B, N, GK)

    itemsize = jnp.dtype(x.dtype).itemsize
    # Packed sublane height: f32 -> 8, bf16 -> 16, int8/fp8 -> 32.
    sub = max(8, 32 // max(itemsize, 1))

    # VMEM budget: double-buffered input block (tn*GK) + output block (G*tn*K).
    per_row_bytes = 2 * 2 * GK * itemsize
    tn = vmem_budget_bytes // max(per_row_bytes, 1)
    tn = max(sub, min(tn, max_tile_rows))
    tn = (tn // sub) * sub
    n_ceil = ((N + sub - 1) // sub) * sub
    tn = min(tn, n_ceil)

    nb = pl.cdiv(N, tn)

    kernel = functools.partial(_l2norm_kernel, G=G, K=K)

    out = pl.pallas_call(
        kernel,
        out_shape=jax.ShapeDtypeStruct((B, G, N, K), x.dtype),
        grid_spec=pltpu.PrefetchScalarGridSpec(
            num_scalar_prefetch=0,
            grid=(B, nb),
            in_specs=[pl.BlockSpec((1, tn, GK), lambda b, n: (b, n, 0))],
            out_specs=pl.BlockSpec((1, G, tn, K), lambda b, n: (b, 0, n, 0)),
        ),
        compiler_params=pltpu.CompilerParams(
            dimension_semantics=("parallel", "parallel"),
            vmem_limit_bytes=32 * 1024 * 1024,
        ),
        cost_estimate=pl.CostEstimate(
            flops=3 * B * N * G * K,
            transcendentals=B * N * G,
            bytes_accessed=2 * B * N * G * K * itemsize,
        ),
    )(x3)
    return out


def _reference(x, num_groups):
    B, N, M, d = x.shape
    G = num_groups
    K = (M * d) // G
    xg = x.reshape(B, N, G, K).transpose(0, 2, 1, 3).astype(jnp.float32)
    norm = jnp.sqrt(jnp.sum(xg * xg, axis=-1, keepdims=True))
    return (xg / jnp.maximum(norm, _EPS)).astype(x.dtype)


if __name__ == "__main__":
    key = jax.random.PRNGKey(0)
    B, N, M, d = 2, 8, 8, 32
    num_groups = 2  # K = M*d/G = 128 (lane-aligned)

    x = jax.random.normal(key, (B, N, M, d), dtype=jnp.float32)

    out = grouped_double_normalization(x, num_groups)
    out = jax.block_until_ready(out)

    ref = _reference(x, num_groups)
    assert out.shape == (B, num_groups, N, (M * d) // num_groups)
    assert jnp.allclose(out, ref, atol=1e-5, rtol=1e-5), "mismatch vs reference"

    print("KERNEL_OK")
</pallas_src>

<mosaic_0001>
module attributes {stable_mosaic.version = 11 : i64} {
  func.func @_l2norm_kernel(%arg0: i32, %arg1: i32, %arg2: memref<1x8x256xf32, #tpu.memory_space<vmem>>, %arg3: memref<1x2x8x128xf32, #tpu.memory_space<vmem>>) attributes {dimension_semantics = [#tpu.dimension_semantics<parallel>, #tpu.dimension_semantics<parallel>], iteration_bounds = array<i64: 2, 1>, scalar_prefetch = 0 : i64, scratch_operands = 0 : i64, tpu.core_type = #tpu.core_type<tc>, window_params = [{transform_indices = @transform_0, window_bounds = array<i64: 1, 8, 256>}, {transform_indices = @transform_1, window_bounds = array<i64: 1, 2, 8, 128>}]} {
    %c0 = arith.constant 0 : index
    %c0_0 = arith.constant 0 : index
    %c0_1 = arith.constant 0 : index
    %0 = vector.load %arg2[%c0, %c0_0, %c0_1] : memref<1x8x256xf32, #tpu.memory_space<vmem>>, vector<1x8x128xf32>
    %1 = vector.shape_cast %0 : vector<1x8x128xf32> to vector<8x128xf32>
    %2 = arith.mulf %1, %1 : vector<8x128xf32>
    %cst = arith.constant dense<0.000000e+00> : vector<8xf32>
    %3 = vector.multi_reduction <add>, %2, %cst [1] : vector<8x128xf32> to vector<8xf32>
    %4 = vector.shape_cast %3 : vector<8xf32> to vector<8x1xf32>
    %cst_2 = arith.constant 1.000000e-24 : f32
    %5 = vector.broadcast %cst_2 : f32 to vector<8x1xf32>
    %6 = arith.maximumf %4, %5 : vector<8x1xf32>
    %7 = math.rsqrt %6 : vector<8x1xf32>
    %8 = vector.broadcast %7 : vector<8x1xf32> to vector<8x128xf32>
    %9 = arith.mulf %1, %8 : vector<8x128xf32>
    %c0_3 = arith.constant 0 : index
    %c0_4 = arith.constant 0 : index
    %c0_5 = arith.constant 0 : index
    %c0_6 = arith.constant 0 : index
    %10 = vector.load %arg3[%c0_3, %c0_4, %c0_5, %c0_6] : memref<1x2x8x128xf32, #tpu.memory_space<vmem>>, vector<1x1x8x128xf32>
    %11 = vector.shape_cast %10 : vector<1x1x8x128xf32> to vector<8x128xf32>
    %12 = vector.shape_cast %9 : vector<8x128xf32> to vector<1x1x8x128xf32>
    tpu.vector_store %arg3[%c0_3, %c0_4, %c0_5, %c0_6], %12 {strides = array<i32>} : memref<1x2x8x128xf32, #tpu.memory_space<vmem>>, vector<1x1x8x128xf32>,
    %c0_7 = arith.constant 0 : index
    %c0_8 = arith.constant 0 : index
    %c128 = arith.constant 128 : index
    %13 = vector.load %arg2[%c0_7, %c0_8, %c128] : memref<1x8x256xf32, #tpu.memory_space<vmem>>, vector<1x8x128xf32>
    %14 = vector.shape_cast %13 : vector<1x8x128xf32> to vector<8x128xf32>
    %15 = arith.mulf %14, %14 : vector<8x128xf32>
    %cst_9 = arith.constant dense<0.000000e+00> : vector<8xf32>
    %16 = vector.multi_reduction <add>, %15, %cst_9 [1] : vector<8x128xf32> to vector<8xf32>
    %17 = vector.shape_cast %16 : vector<8xf32> to vector<8x1xf32>
    %cst_10 = arith.constant 1.000000e-24 : f32
    %18 = vector.broadcast %cst_10 : f32 to vector<8x1xf32>
    %19 = arith.maximumf %17, %18 : vector<8x1xf32>
    %20 = math.rsqrt %19 : vector<8x1xf32>
    %21 = vector.broadcast %20 : vector<8x1xf32> to vector<8x128xf32>
    %22 = arith.mulf %14, %21 : vector<8x128xf32>
    %c0_11 = arith.constant 0 : index
    %c1 = arith.constant 1 : index
    %c0_12 = arith.constant 0 : index
    %c0_13 = arith.constant 0 : index
    %23 = vector.load %arg3[%c0_11, %c1, %c0_12, %c0_13] : memref<1x2x8x128xf32, #tpu.memory_space<vmem>>, vector<1x1x8x128xf32>
    %24 = vector.shape_cast %23 : vector<1x1x8x128xf32> to vector<8x128xf32>
    %25 = vector.shape_cast %22 : vector<8x128xf32> to vector<1x1x8x128xf32>
    tpu.vector_store %arg3[%c0_11, %c1, %c0_12, %c0_13], %25 {strides = array<i32>} : memref<1x2x8x128xf32, #tpu.memory_space<vmem>>, vector<1x1x8x128xf32>,
    return
  }
  func.func @transform_0(%arg0: i32, %arg1: i32) -> (i32, i32, i32) {
    %c0_i32 = arith.constant 0 : i32
    %c0_i32_0 = arith.constant 0 : i32
    return %arg0, %arg1, %c0_i32 : i32, i32, i32
  }
  func.func @transform_1(%arg0: i32, %arg1: i32) -> (i32, i32, i32, i32) {
    %c0_i32 = arith.constant 0 : i32
    %c0_i32_0 = arith.constant 0 : i32
    %c0_i32_1 = arith.constant 0 : i32
    return %arg0, %c0_i32, %arg1, %c0_i32_0 : i32, i32, i32, i32
  }
}

</mosaic_0001>

<llo_original>
// kernel: tpu_custom_call.1
$region0: #{tpu_custom_call.1}
  #allocation0 [shape = 'u32[]', space=smem, size = 0x4, offset = 0x4, fixed_abs, tag = 'smem constant byte address 0x4 - core index']
  #allocation1 [shape = 'u32[144,128]{1,0:T(1,128)}', space=vmem, size = 0x12000, scoped, tag = 'internal scratch']
  %s0 = inlined_call_operand.hbm [shape: f32[2,8,256], index: 0, kind: input, shape index: {}]
  %s1 = inlined_call_operand.hbm [shape: f32[2,2,8,128], index: 1, kind: output, shape index: {}]
  %s2 = sld [smem:[#allocation0]]
  $region41: #{tpu_custom_call.1} parent=0
    _
  %s4 = ssub.s32 1, %s2
  %s5 = scalar_select 0, %s4, %s2
  $region1: #{tpu_custom_call.1} parent=0
    #allocation2 [shape = 'u8[16384]{0}', space=vmem, size = 0x4000, scoped, tag = 'input window, operand 0']
    #allocation3 [shape = 's32[2]{0}', space=sflag, size = 0x8, scoped, tag = 'scoped memory for tpu_custom_call.1']
    #allocation4 [shape = 's32[2]{0}', space=sflag, size = 0x8, scoped, tag = 'scoped memory for tpu_custom_call.1']
    #allocation5 [shape = 'u8[16384]{0}', space=vmem, size = 0x4000, scoped, tag = 'output window, operand 0']
    %6 = vsyncpa [#allocation3], 0
    %s7 = scalar_lea.sflag [#allocation3], 1
    %8 = vsyncpa %s7, 0
    %9 = vsyncpa [#allocation4], 0
    %s10 = scalar_lea.sflag [#allocation4], 1
    %11 = vsyncpa %s10, 0
    loop: start=0, step=1, limit=4
    $region2: #{tpu_custom_call.1} parent=1 // loop_pre_header
      _
    $region3: #{tpu_custom_call.1} parent=1 // loop_header
      %s13 = sphi 0, %s17
      %p14 = scmp.ge.s32.totalorder %s13, 4
      %s20 = sphi 0, %s32
      %s21 = sphi 0, %s28
      %s22 = sphi 0, %s20
      %s23 = sphi 0, %s21
      %s24 = sphi 0, %s22
      %s25 = sphi 0, %s23
      %s37 = sphi 0, %s39
      %s40 = sphi 0, %s37
      %s41 = sphi 0, %s40
      %s57 = sphi 0, %s41
      %s65 = sphi 0, %s67
      %s68 = sphi 0, %s65
      %s69 = sphi 0, %s68
      %s85 = sphi 0, %s69
    $region4: #{tpu_custom_call.1} parent=1 // loop_header_branch
      %16 = sbr.rel (%p14) target = $region8
    $region5: #{tpu_custom_call.1} parent=1 // loop_body
      %s18 = ssub.s32 %s13, 1
      %s19 = ssub.s32 %s13, 2
      %s26 = sadd.s32 1, %s21
      %p27 = scmp.ge.s32.totalorder %s26, 1
      %s28 = scalar_select %p27, 0, %s26
      %s29 = sadd.s32 1, %s20
      %s30 = scalar_select %p27, %s29, %s20
      %p31 = scmp.ge.s32.totalorder %s30, 2
      %s32 = scalar_select %p31, 0, %s30
      %s33 = ssub.s32 %s20, %s32
      %s34 = ssub.s32 %s21, %s28
      %s35 = sor.u32 %s33, %s34
      %p36 = scmp.eq.s32.totalorder %s35, 0
      %s38 = sadd.s32 %s37, 1
      %s39 = scalar_select %p36, %s37, %s38
      %p42 = pneg %p36
      %p43 = scmp.eq.s32.totalorder %s13, 1
      %p44 = por %p42, %p43
      %p45 = scmp.ne.s32.totalorder %s37, %s40
      %p46 = scmp.eq.s32.totalorder %s13, 0
      %p47 = por %p45, %p46
      %p48 = scmp.ne.s32.totalorder %s37, %s40
      %p49 = scmp.eq.s32.totalorder %s18, 1
      %p50 = por %p48, %p49
      %p51 = scmp.ne.s32.totalorder %s40, %s41
      %p52 = scmp.eq.s32.totalorder %s18, 0
      %p53 = por %p51, %p52
      %p54 = scmp.ne.s32.totalorder %s40, %s41
      %p55 = scmp.eq.s32.totalorder %s19, 1
      %p56 = por %p54, %p55
      %p58 = scmp.ne.s32.totalorder %s41, %s57
      %p59 = scmp.eq.s32.totalorder %s19, 0
      %p60 = por %p58, %p59
      %s61 = ssub.s32 %s20, %s32
      %s62 = ssub.s32 %s21, %s28
      %s63 = sor.u32 %s61, %s62
      %p64 = scmp.eq.s32.totalorder %s63, 0
      %s66 = sadd.s32 %s65, 1
      %s67 = scalar_select %p64, %s65, %s66
      %p70 = pneg %p64
      %p71 = scmp.eq.s32.totalorder %s13, 1
      %p72 = por %p70, %p71
      %p73 = scmp.ne.s32.totalorder %s65, %s68
      %p74 = scmp.eq.s32.totalorder %s13, 0
      %p75 = por %p73, %p74
      %p76 = scmp.ne.s32.totalorder %s65, %s68
      %p77 = scmp.eq.s32.totalorder %s18, 1
      %p78 = por %p76, %p77
      %p79 = scmp.ne.s32.totalorder %s68, %s69
      %p80 = scmp.eq.s32.totalorder %s18, 0
      %p81 = por %p79, %p80
      %p82 = scmp.ne.s32.totalorder %s68, %s69
      %p83 = scmp.eq.s32.totalorder %s19, 1
      %p84 = por %p82, %p83
      %p86 = scmp.ne.s32.totalorder %s69, %s85
      %p87 = scmp.eq.s32.totalorder %s19, 0
      %p88 = por %p86, %p87
      %p89 = scmp.le.s32.totalorder 1, %s13
      %p90 = scmp.lt.s32.totalorder %s13, 3
      %p91 = pnand %p89, %p90
      %p92 = pneg %p91
      // Predicated region
      $region9: #{tpu_custom_call.1} parent=5 // pred_check
        _
      $region10: #{tpu_custom_call.1} parent=5 // pred_check_branch
        %94 = sbr.rel (%p91) target = $region12
      $region11: #{tpu_custom_call.1} parent=5 // pred_region
        %s95 = ssub.s32 %s13, 1
      $region12: #{tpu_custom_call.1} parent=5 // pred_fallthru
        _
      %p96 = scmp.lt.s32.totalorder %s13, 2
      // Predicated region
      $region13: #{tpu_custom_call.1} parent=5 // pred_check
        %p97 = pneg %p96
      $region14: #{tpu_custom_call.1} parent=5 // pred_check_branch
        %99 = sbr.rel (%p97) target = $region16
      $region15: #{tpu_custom_call.1} parent=5 // pred_region
        // Predicated region
        $region17: #{tpu_custom_call.1} parent=15 // pred_check
          %p100 = pneg %p47
        $region18: #{tpu_custom_call.1} parent=15 // pred_check_branch
          %102 = sbr.rel (%p100) target = $region20
        $region19: #{tpu_custom_call.1} parent=15 // pred_region
          %s103 = sand.u32 %s37, 1
          %s104 = scalar_lea.sflag [#allocation3], %s103
          %s105 = sand.u32 %s37, 1
          %s106 = smul.addr %s105, 16
          %s107 = scalar_lea.vmem [#allocation2], %s106
          %s109 = ssub.s32 256, 256
          %110 = vsyncadd %s104, %s109
          %s111 = smul.addr %s21, 2
          %s112 = smul.addr %s20, 2
          %s113 = sadd.s32 %s111, %s112
          %s114 = smul.addr %s113, 128
          %s115 = scalar_lea.hbm %s0, %s114
          %s117 = sshll.u32 %s107, 4
          %s118 = int_to_ptr.vmem [resolvable:$true] %s117
          %120 = dma.hbm_to_vmem [thread:$0]  %s115, 256, %s118, %s104
        $region20: #{tpu_custom_call.1} parent=15 // pred_fallthru
          _
      $region16: #{tpu_custom_call.1} parent=5 // pred_fallthru
        _
      %p121 = scmp.le.s32.totalorder 1, %s13
      %p122 = scmp.lt.s32.totalorder %s13, 3
      %p123 = pnand %p121, %p122
      %p124 = pneg %p123
      // Predicated region
      $region21: #{tpu_custom_call.1} parent=5 // pred_check
        _
      $region22: #{tpu_custom_call.1} parent=5 // pred_check_branch
        %126 = sbr.rel (%p123) target = $region24
      $region23: #{tpu_custom_call.1} parent=5 // pred_region
        %s127 = ssub.s32 %s13, 1
        %s128 = sand.u32 %s40, 1
        %s129 = scalar_lea.sflag [#allocation3], %s128
        %s130 = sand.u32 %s40, 1
        %s131 = smul.addr %s130, 16
        %s132 = scalar_lea.vmem [#allocation2], %s131
        // Predicated region
        $region25: #{tpu_custom_call.1} parent=23 // pred_check
          %p133 = pneg %p53
        $region26: #{tpu_custom_call.1} parent=23 // pred_check_branch
          %135 = sbr.rel (%p133) target = $region28
        $region27: #{tpu_custom_call.1} parent=23 // pred_region
          %136 = dma.done %s129, 256
        $region28: #{tpu_custom_call.1} parent=23 // pred_fallthru
          _
        %s137 = sand.u32 %s40, 1
        %s138 = scalar_lea.sflag [#allocation3], %s137
        %s139 = sand.u32 %s40, 1
        %s140 = smul.addr %s139, 16
        %s141 = scalar_lea.vmem [#allocation2], %s140
        %p142 = pneg %p53
        %p143 = pneg %p50
        %p144 = pneg %p81
        %p145 = pneg %p78
        %s146 = sand.u32 %s68, 1
        %s147 = scalar_lea.sflag [#allocation4], %s146
        %s148 = sand.u32 %s68, 1
        %s149 = smul.addr %s148, 16
        %s150 = scalar_lea.vmem [#allocation5], %s149
        %v151 = vld [vmem:[%s132] sm:$0xff]
        %v152 = vmul.f32 %v151, %v151
        %153 = vadd.xlane.f32.xlu0 %v152
        %v154 = vpop.xlane.xlu0 %153
        %v155 = vmax.f32 %v154, 1e-24
        %v156 = vrsqrt.pop %v155
        %v157 = vmul.f32 %v151, %v156
        %158 = vst [vmem:[%s150] sm:$0xff] %v157
        %v159 = vld [vmem:[%s132 + $0x8] sm:$0xff]
        %v160 = vmul.f32 %v159, %v159
        %161 = vadd.xlane.f32.xlu0 %v160
        %v162 = vpop.xlane.xlu0 %161
        %v163 = vmax.f32 %v162, 1e-24
        %v164 = vrsqrt.pop %v163
        %v165 = vmul.f32 %v159, %v164
        %s166 = scalar_lea.vmem %s150, 8 [#allocation5]
        %167 = vst [vmem:[%s166] sm:$0xff] %v165
        %s168 = sand.u32 %s68, 1
        %s169 = scalar_lea.sflag [#allocation4], %s168
        %s170 = sand.u32 %s68, 1
        %s171 = smul.addr %s170, 16
        %s172 = scalar_lea.vmem [#allocation5], %s171
        // Predicated region
        $region29: #{tpu_custom_call.1} parent=23 // pred_check
          %p173 = pneg %p78
        $region30: #{tpu_custom_call.1} parent=23 // pred_check_branch
          %175 = sbr.rel (%p173) target = $region32
        $region31: #{tpu_custom_call.1} parent=23 // pred_region
          %s177 = ssub.s32 256, 256
          %178 = vsyncadd %s169, %s177
          %s179 = smul.addr %s22, 2
          %s180 = sadd.s32 %s23, %s179
          %s181 = smul.addr %s180, 128
          %s182 = scalar_lea.hbm %s1, %s181
          %s183 = sshll.u32 %s172, 4
          %s184 = int_to_ptr.vmem [resolvable:$true] %s183
          %189 = dma.vmem_to_hbm [thread:$0]  %s184, 256, %s182, %s169, 128, 128, 8
        $region32: #{tpu_custom_call.1} parent=23 // pred_fallthru
          _
      $region24: #{tpu_custom_call.1} parent=5 // pred_fallthru
        _
      %p190 = scmp.le.s32.totalorder 2, %s13
      // Predicated region
      $region33: #{tpu_custom_call.1} parent=5 // pred_check
        %p191 = pneg %p190
      $region34: #{tpu_custom_call.1} parent=5 // pred_check_branch
        %193 = sbr.rel (%p191) target = $region36
      $region35: #{tpu_custom_call.1} parent=5 // pred_region
        %s194 = ssub.s32 %s13, 2
        // Predicated region
        $region37: #{tpu_custom_call.1} parent=35 // pred_check
          %p195 = pneg %p84
        $region38: #{tpu_custom_call.1} parent=35 // pred_check_branch
          %197 = sbr.rel (%p195) target = $region40
        $region39: #{tpu_custom_call.1} parent=35 // pred_region
          %s198 = sand.u32 %s69, 1
          %s199 = scalar_lea.sflag [#allocation4], %s198
          %s200 = sand.u32 %s69, 1
          %s201 = smul.addr %s200, 16
          %s202 = scalar_lea.vmem [#allocation5], %s201
          %203 = dma.done %s199, 256
        $region40: #{tpu_custom_call.1} parent=35 // pred_fallthru
          _
      $region36: #{tpu_custom_call.1} parent=5 // pred_fallthru
        _
    $region6: #{tpu_custom_call.1} parent=1 // loop_footer
      %s17 = sadd.s32 1, %s13
    $region7: #{tpu_custom_call.1} parent=1 // loop_footer_branch
      %12 = sbr.rel target = $region3
    $region8: #{tpu_custom_call.1} parent=1 // loop_exit
      _
    %204 = vsyncpa [#allocation3], 1
    %s205 = scalar_lea.sflag [#allocation3], 1
    %206 = vsyncpa %s205, 1
    %207 = vsyncpa [#allocation4], 1
    %s208 = scalar_lea.sflag [#allocation4], 1
    %209 = vsyncpa %s208, 1

</llo_original>
